<compile_context>
chip_gen: v6e
topology: v6e:2x2x1
jax: 0.10.0
libtpu: 0.0.40
codegen_flags: <defaults>
</compile_context>

<pallas_src>
import functools

import jax
import jax.numpy as jnp
from jax.experimental import pallas as pl
from jax.experimental.pallas import tpu as pltpu


# ----------------------------------------------------------------------------
# helpers
# ----------------------------------------------------------------------------
def _pick_tile_n(n, per_lane_bytes, budget_bytes=12 << 20):
    """Largest lane tile (multiple of 128) dividing N whose double-buffered working
    set stays under budget_bytes; falls back to 128 / full N."""
    for t in (1024, 512, 256, 128):
        if n % t == 0 and 2 * per_lane_bytes * t <= budget_bytes:
            return t
    if n % 128 == 0:
        return 128
    return n  # non-multiple of 128: block must equal the full array dim


def _compiler_params(block_bytes):
    # Explicit VMEM budget: double-buffered blocks + headroom, capped well inside
    # v7x's 64 MiB physical VMEM (v5e/v6e have 128 MiB).
    limit = int(min(max(2 * block_bytes + (4 << 20), 8 << 20), 40 << 20))
    return pltpu.CompilerParams(
        dimension_semantics=("parallel", "parallel"),
        vmem_limit_bytes=limit,
    )


# ----------------------------------------------------------------------------
# Pallas kernels
# ----------------------------------------------------------------------------
def _conv_bn_relu_kernel(x_ref, w_ref, b_ref, o_ref):
    # x: (Cin, TN)  w: (Cmid, Cin)  b: (Cmid, 1)  ->  o: (Cmid, TN)   [lane axis = TN]
    y = jnp.dot(w_ref[...], x_ref[...], preferred_element_type=jnp.float32) + b_ref[...]
    o_ref[...] = jnp.maximum(y, 0.0).astype(o_ref.dtype)


def _agg_conv2_residual_kernel(*refs, has_shortcut):
    # Fused: neighbor max-pool + conv2(+BN) + shortcut(+BN) + residual add + ReLU.
    #   g: (S, Cmid, TN)  -- invalid neighbors already zeroed in XLA; since h >= 0
    #                        (post-ReLU) a plain max == masked max, and fully-masked
    #                        points aggregate to 0.
    #   x: (Cin, TN)  w2: (Cout, Cmid)  b2: (Cout, 1)
    #   [ws: (Cout, Cin)  bs: (Cout, 1)]              ->  o: (Cout, TN)
    if has_shortcut:
        g_ref, x_ref, w2_ref, b2_ref, ws_ref, bs_ref, o_ref = refs
    else:
        g_ref, x_ref, w2_ref, b2_ref, o_ref = refs

    agg = jnp.max(g_ref[...], axis=0)                     # (Cmid, TN): S-1 VPU maxes
    y = jnp.dot(w2_ref[...], agg, preferred_element_type=jnp.float32) + b2_ref[...]
    x = x_ref[...]
    if has_shortcut:
        ident = jnp.dot(ws_ref[...], x, preferred_element_type=jnp.float32) + bs_ref[...]
    else:
        ident = x.astype(jnp.float32)
    o_ref[...] = jnp.maximum(y + ident, 0.0).astype(o_ref.dtype)


# ----------------------------------------------------------------------------
# Pallas wrappers (tiled over batch and the point axis N; weights stay VMEM-resident)
# ----------------------------------------------------------------------------
def conv_bn_relu(x, w_folded, bias):
    # x: (B, Cin, N), w_folded: (Cmid, Cin), bias: (Cmid, 1) -> (B, Cmid, N)
    B, Cin, N = x.shape
    Cmid = w_folded.shape[0]
    itemsize = jnp.dtype(x.dtype).itemsize
    tile_n = _pick_tile_n(N, (Cin + Cmid) * itemsize)
    grid = (B, pl.cdiv(N, tile_n))
    block_bytes = (Cin + Cmid) * tile_n * itemsize + (Cmid * Cin + Cmid) * 4
    return pl.pallas_call(
        _conv_bn_relu_kernel,
        out_shape=jax.ShapeDtypeStruct((B, Cmid, N), x.dtype),
        grid=grid,
        in_specs=[
            pl.BlockSpec((None, Cin, tile_n), lambda b, n: (b, 0, n)),
            pl.BlockSpec((Cmid, Cin), lambda b, n: (0, 0)),   # constant -> VMEM-resident
            pl.BlockSpec((Cmid, 1), lambda b, n: (0, 0)),
        ],
        out_specs=pl.BlockSpec((None, Cmid, tile_n), lambda b, n: (b, 0, n)),
        compiler_params=_compiler_params(block_bytes),
    )(x, w_folded, bias)


def agg_conv2_residual(gathered, x, w2f, b2, wsf=None, bsf=None):
    # gathered: (B, S, Cmid, N) pre-masked, x: (B, Cin, N) -> (B, Cout, N)
    B, S, Cmid, N = gathered.shape
    Cin = x.shape[1]
    Cout = w2f.shape[0]
    has_shortcut = wsf is not None
    itemsize = jnp.dtype(x.dtype).itemsize
    per_lane = (S * Cmid + Cin + Cout) * itemsize
    tile_n = _pick_tile_n(N, per_lane)
    grid = (B, pl.cdiv(N, tile_n))

    in_specs = [
        pl.BlockSpec((None, S, Cmid, tile_n), lambda b, n: (b, 0, 0, n)),
        pl.BlockSpec((None, Cin, tile_n), lambda b, n: (b, 0, n)),
        pl.BlockSpec((Cout, Cmid), lambda b, n: (0, 0)),
        pl.BlockSpec((Cout, 1), lambda b, n: (0, 0)),
    ]
    args = [gathered, x, w2f, b2]
    block_bytes = per_lane * tile_n + (Cout * Cmid + Cout) * 4
    if has_shortcut:
        in_specs += [
            pl.BlockSpec((Cout, Cin), lambda b, n: (0, 0)),
            pl.BlockSpec((Cout, 1), lambda b, n: (0, 0)),
        ]
        args += [wsf, bsf]
        block_bytes += (Cout * Cin + Cout) * 4

    return pl.pallas_call(
        functools.partial(_agg_conv2_residual_kernel, has_shortcut=has_shortcut),
        out_shape=jax.ShapeDtypeStruct((B, Cout, N), x.dtype),
        grid=grid,
        in_specs=in_specs,
        out_specs=pl.BlockSpec((None, Cout, tile_n), lambda b, n: (b, 0, n)),
        compiler_params=_compiler_params(block_bytes),
    )(*args)


# ----------------------------------------------------------------------------
# Plain-JAX glue: neighbor search (ball query via kNN + radius mask) and gather
# ----------------------------------------------------------------------------
def knn_neighbors(xyz, mask, nsample, radius):
    # xyz: (B, 3, N), mask: (B, N) bool -> idx (B, N, S) int32, valid (B, N, S) bool
    pts = jnp.transpose(xyz, (0, 2, 1))                           # (B, N, 3)
    sq = jnp.sum(pts * pts, axis=-1)                              # (B, N)
    dots = jnp.einsum("bnd,bmd->bnm", pts, pts, precision="highest")
    d2 = sq[:, :, None] + sq[:, None, :] - 2.0 * dots             # pairwise sq. dist
    d2 = jnp.where(mask[:, None, :], d2, 1e10)                    # hide invalid support pts
    neg_d2, idx = jax.lax.top_k(-d2, nsample)                     # nearest (incl. self)
    valid = (-neg_d2 <= radius * radius) & mask[:, :, None]       # query-mask gated
    return idx, valid


# ----------------------------------------------------------------------------
# Bottleneck forward (downsample=False path)
# ----------------------------------------------------------------------------
def bottleneck_forward(xyz, mask, features, params, *, radius, nsample):
    query_xyz, query_mask = xyz, mask

    # conv1 + folded BN + ReLU  (Pallas, lane axis = N)
    h = conv_bn_relu(features, params["w1f"], params["b1"])            # (B, Cmid, N)

    # neighbor search + gather (plain JAX/XLA); gather lands directly in the
    # (B, S, Cmid, N) layout the Pallas kernel consumes (N stays minor / lane-dense,
    # no minor-axis transpose of the big gathered tensor).
    idx, valid = knn_neighbors(xyz, mask, nsample, radius)             # (B, N, S)
    idx_t = jnp.transpose(idx, (0, 2, 1))                              # (B, S, N) tiny
    valid_t = jnp.transpose(valid, (0, 2, 1))                          # (B, S, N) tiny
    gathered = jnp.take_along_axis(h[:, None, :, :], idx_t[:, :, None, :], axis=-1)
    # Fold the mask here (fuses with the gather). h >= 0 post-ReLU, so the kernel's
    # plain max reproduces the masked max and zero-fills fully-masked points.
    gathered = jnp.where(valid_t[:, :, None, :], gathered, 0.0)        # (B, S, Cmid, N)

    # fused: neighbor max + conv2(+BN) + shortcut(+BN) + residual add + ReLU
    if "wsf" in params:
        out = agg_conv2_residual(gathered, features, params["w2f"], params["b2"],
                                 params["wsf"], params["bsf"])
    else:
        out = agg_conv2_residual(gathered, features, params["w2f"], params["b2"])
    return query_xyz, query_mask, out


# ----------------------------------------------------------------------------
# Deterministic parameter construction (eval-mode BN folded into the conv weights)
# ----------------------------------------------------------------------------
def _fold_bn(key, c, eps=1e-5):
    k1, k2, k3 = jax.random.split(key, 3)
    gamma = 1.0 + 0.1 * jax.random.normal(k1, (c,), jnp.float32)
    beta = 0.1 * jax.random.normal(k2, (c,), jnp.float32)
    running_mean = 0.1 * jax.random.normal(k3, (c,), jnp.float32)
    running_var = jnp.ones((c,), jnp.float32)
    scale = gamma / jnp.sqrt(running_var + eps)
    bias = beta - running_mean * scale
    return scale, bias


def make_params(key, in_channels, out_channels, bottleneck_ratio):
    c_mid = out_channels // bottleneck_ratio
    ks = jax.random.split(key, 6)
    w1 = 0.1 * jax.random.normal(ks[0], (c_mid, in_channels), jnp.float32)
    s1, b1 = _fold_bn(ks[1], c_mid)
    w2 = 0.1 * jax.random.normal(ks[2], (out_channels, c_mid), jnp.float32)
    s2, b2 = _fold_bn(ks[3], out_channels)
    params = {
        # BN scale folded into the conv weights host-side: one DMA stream and one
        # VPU multiply saved per kernel call.
        "w1f": w1 * s1[:, None], "b1": b1[:, None],
        "w2f": w2 * s2[:, None], "b2": b2[:, None],
    }
    if in_channels != out_channels:
        ws = 0.1 * jax.random.normal(ks[4], (out_channels, in_channels), jnp.float32)
        ss, bs = _fold_bn(ks[5], out_channels)
        params["wsf"] = ws * ss[:, None]
        params["bsf"] = bs[:, None]
    return params


# ----------------------------------------------------------------------------
if __name__ == "__main__":
    B, N = 2, 512
    in_channels, out_channels, bottleneck_ratio = 8, 16, 2
    radius, nsample = 0.5, 8

    key = jax.random.PRNGKey(0)
    k_xyz, k_feat, k_par = jax.random.split(key, 3)

    xyz = jax.random.uniform(k_xyz, (B, 3, N), dtype=jnp.float32)
    # last 7 points of batch 1 are padding
    mask = jnp.arange(N)[None, :] < jnp.array([N, N - 7])[:, None]
    features = jax.random.normal(k_feat, (B, in_channels, N), dtype=jnp.float32)

    params = make_params(k_par, in_channels, out_channels, bottleneck_ratio)

    fwd = jax.jit(functools.partial(bottleneck_forward, radius=radius, nsample=nsample))
    q_xyz, q_mask, out = fwd(xyz, mask, features, params)
    jax.block_until_ready(out)

    assert out.shape == (B, out_channels, N)
    assert bool(jnp.all(jnp.isfinite(out)))
    print("KERNEL_OK")
</pallas_src>

<mosaic_0001>
module attributes {stable_mosaic.version = 11 : i64} {
  func.func @_conv_bn_relu_kernel(%arg0: i32, %arg1: i32, %arg2: memref<1x8x512xf32, #tpu.memory_space<vmem>>, %arg3: memref<8x8xf32, #tpu.memory_space<vmem>>, %arg4: memref<8x1xf32, #tpu.memory_space<vmem>>, %arg5: memref<1x8x512xf32, #tpu.memory_space<vmem>>) attributes {dimension_semantics = [#tpu.dimension_semantics<parallel>, #tpu.dimension_semantics<parallel>], iteration_bounds = array<i64: 2, 1>, scalar_prefetch = 0 : i64, scratch_operands = 0 : i64, tpu.core_type = #tpu.core_type<tc>, window_params = [{transform_indices = @transform_0, window_bounds = array<i64: 1, 8, 512>}, {pipeline_mode = #tpu.pipeline_mode<synchronous>, transform_indices = @transform_1, window_bounds = array<i64: 8, 8>}, {pipeline_mode = #tpu.pipeline_mode<synchronous>, transform_indices = @transform_2, window_bounds = array<i64: 8, 1>}, {transform_indices = @transform_3, window_bounds = array<i64: 1, 8, 512>}]} {
    %c0 = arith.constant 0 : index
    %c0_0 = arith.constant 0 : index
    %0 = vector.load %arg3[%c0, %c0_0] : memref<8x8xf32, #tpu.memory_space<vmem>>, vector<8x8xf32>
    %c0_1 = arith.constant 0 : index
    %c0_2 = arith.constant 0 : index
    %c0_3 = arith.constant 0 : index
    %1 = vector.load %arg2[%c0_1, %c0_2, %c0_3] : memref<1x8x512xf32, #tpu.memory_space<vmem>>, vector<1x8x512xf32>
    %2 = vector.shape_cast %1 : vector<1x8x512xf32> to vector<8x512xf32>
    %cst = arith.constant dense<0.000000e+00> : vector<8x512xf32>
    %3 = tpu.matmul %0, %2, %cst {dimension_numbers = #tpu.dot_dimension_numbers<[1], [0], [0], [1], [0, 0, 1, 1], [], []>} : vector<8x8xf32>, vector<8x512xf32>, vector<8x512xf32> -> vector<8x512xf32>
    %c0_4 = arith.constant 0 : index
    %c0_5 = arith.constant 0 : index
    %4 = vector.load %arg4[%c0_4, %c0_5] : memref<8x1xf32, #tpu.memory_space<vmem>>, vector<8x1xf32>
    %5 = vector.broadcast %4 : vector<8x1xf32> to vector<8x512xf32>
    %6 = arith.addf %3, %5 : vector<8x512xf32>
    %cst_6 = arith.constant 0.000000e+00 : f32
    %7 = vector.broadcast %cst_6 : f32 to vector<8x512xf32>
    %8 = arith.maximumf %6, %7 : vector<8x512xf32>
    %c0_7 = arith.constant 0 : index
    %c0_8 = arith.constant 0 : index
    %c0_9 = arith.constant 0 : index
    %9 = vector.load %arg5[%c0_7, %c0_8, %c0_9] : memref<1x8x512xf32, #tpu.memory_space<vmem>>, vector<1x8x512xf32>
    %10 = vector.shape_cast %9 : vector<1x8x512xf32> to vector<8x512xf32>
    %11 = vector.shape_cast %8 : vector<8x512xf32> to vector<1x8x512xf32>
    tpu.vector_store %arg5[%c0_7, %c0_8, %c0_9], %11 {strides = array<i32>} : memref<1x8x512xf32, #tpu.memory_space<vmem>>, vector<1x8x512xf32>,
    return
  }
  func.func @transform_0(%arg0: i32, %arg1: i32) -> (i32, i32, i32) {
    %c0_i32 = arith.constant 0 : i32
    %c0_i32_0 = arith.constant 0 : i32
    return %arg0, %c0_i32, %arg1 : i32, i32, i32
  }
  func.func @transform_1(%arg0: i32, %arg1: i32) -> (i32, i32) {
    %c0_i32 = arith.constant 0 : i32
    %c0_i32_0 = arith.constant 0 : i32
    %c0_i32_1 = arith.constant 0 : i32
    return %c0_i32, %c0_i32_0 : i32, i32
  }
  func.func @transform_2(%arg0: i32, %arg1: i32) -> (i32, i32) {
    %c0_i32 = arith.constant 0 : i32
    %c0_i32_0 = arith.constant 0 : i32
    %c0_i32_1 = arith.constant 0 : i32
    return %c0_i32, %c0_i32_0 : i32, i32
  }
  func.func @transform_3(%arg0: i32, %arg1: i32) -> (i32, i32, i32) {
    %c0_i32 = arith.constant 0 : i32
    %c0_i32_0 = arith.constant 0 : i32
    return %arg0, %c0_i32, %arg1 : i32, i32, i32
  }
}

module attributes {stable_mosaic.version = 11 : i64} {
  func.func @_agg_conv2_residual_kernel(%arg0: i32, %arg1: i32, %arg2: memref<1x8x8x512xf32, #tpu.memory_space<vmem>>, %arg3: memref<1x8x512xf32, #tpu.memory_space<vmem>>, %arg4: memref<16x8xf32, #tpu.memory_space<vmem>>, %arg5: memref<16x1xf32, #tpu.memory_space<vmem>>, %arg6: memref<16x8xf32, #tpu.memory_space<vmem>>, %arg7: memref<16x1xf32, #tpu.memory_space<vmem>>, %arg8: memref<1x16x512xf32, #tpu.memory_space<vmem>>) attributes {dimension_semantics = [#tpu.dimension_semantics<parallel>, #tpu.dimension_semantics<parallel>], iteration_bounds = array<i64: 2, 1>, scalar_prefetch = 0 : i64, scratch_operands = 0 : i64, tpu.core_type = #tpu.core_type<tc>, window_params = [{transform_indices = @transform_0, window_bounds = array<i64: 1, 8, 8, 512>}, {transform_indices = @transform_1, window_bounds = array<i64: 1, 8, 512>}, {pipeline_mode = #tpu.pipeline_mode<synchronous>, transform_indices = @transform_2, window_bounds = array<i64: 16, 8>}, {pipeline_mode = #tpu.pipeline_mode<synchronous>, transform_indices = @transform_3, window_bounds = array<i64: 16, 1>}, {pipeline_mode = #tpu.pipeline_mode<synchronous>, transform_indices = @transform_4, window_bounds = array<i64: 16, 8>}, {pipeline_mode = #tpu.pipeline_mode<synchronous>, transform_indices = @transform_5, window_bounds = array<i64: 16, 1>}, {transform_indices = @transform_6, window_bounds = array<i64: 1, 16, 512>}]} {
    %c0 = arith.constant 0 : index
    %c0_0 = arith.constant 0 : index
    %c0_1 = arith.constant 0 : index
    %c0_2 = arith.constant 0 : index
    %0 = vector.load %arg2[%c0, %c0_0, %c0_1, %c0_2] : memref<1x8x8x512xf32, #tpu.memory_space<vmem>>, vector<1x8x8x512xf32>
    %1 = vector.shape_cast %0 : vector<1x8x8x512xf32> to vector<8x8x512xf32>
    %cst = arith.constant dense<0xFF800000> : vector<8x512xf32>
    %2 = vector.multi_reduction <maximumf>, %1, %cst [0] : vector<8x8x512xf32> to vector<8x512xf32>
    %c0_3 = arith.constant 0 : index
    %c0_4 = arith.constant 0 : index
    %3 = vector.load %arg4[%c0_3, %c0_4] : memref<16x8xf32, #tpu.memory_space<vmem>>, vector<16x8xf32>
    %cst_5 = arith.constant dense<0.000000e+00> : vector<16x512xf32>
    %4 = tpu.matmul %3, %2, %cst_5 {dimension_numbers = #tpu.dot_dimension_numbers<[1], [0], [0], [1], [0, 0, 1, 1], [], []>} : vector<16x8xf32>, vector<8x512xf32>, vector<16x512xf32> -> vector<16x512xf32>
    %c0_6 = arith.constant 0 : index
    %c0_7 = arith.constant 0 : index
    %5 = vector.load %arg5[%c0_6, %c0_7] : memref<16x1xf32, #tpu.memory_space<vmem>>, vector<16x1xf32>
    %6 = vector.broadcast %5 : vector<16x1xf32> to vector<16x512xf32>
    %7 = arith.addf %4, %6 : vector<16x512xf32>
    %c0_8 = arith.constant 0 : index
    %c0_9 = arith.constant 0 : index
    %c0_10 = arith.constant 0 : index
    %8 = vector.load %arg3[%c0_8, %c0_9, %c0_10] : memref<1x8x512xf32, #tpu.memory_space<vmem>>, vector<1x8x512xf32>
    %9 = vector.shape_cast %8 : vector<1x8x512xf32> to vector<8x512xf32>
    %c0_11 = arith.constant 0 : index
    %c0_12 = arith.constant 0 : index
    %10 = vector.load %arg6[%c0_11, %c0_12] : memref<16x8xf32, #tpu.memory_space<vmem>>, vector<16x8xf32>
    %cst_13 = arith.constant dense<0.000000e+00> : vector<16x512xf32>
    %11 = tpu.matmul %10, %9, %cst_13 {dimension_numbers = #tpu.dot_dimension_numbers<[1], [0], [0], [1], [0, 0, 1, 1], [], []>} : vector<16x8xf32>, vector<8x512xf32>, vector<16x512xf32> -> vector<16x512xf32>
    %c0_14 = arith.constant 0 : index
    %c0_15 = arith.constant 0 : index
    %12 = vector.load %arg7[%c0_14, %c0_15] : memref<16x1xf32, #tpu.memory_space<vmem>>, vector<16x1xf32>
    %13 = vector.broadcast %12 : vector<16x1xf32> to vector<16x512xf32>
    %14 = arith.addf %11, %13 : vector<16x512xf32>
    %15 = arith.addf %7, %14 : vector<16x512xf32>
    %cst_16 = arith.constant 0.000000e+00 : f32
    %16 = vector.broadcast %cst_16 : f32 to vector<16x512xf32>
    %17 = arith.maximumf %15, %16 : vector<16x512xf32>
    %c0_17 = arith.constant 0 : index
    %c0_18 = arith.constant 0 : index
    %c0_19 = arith.constant 0 : index
    %18 = vector.load %arg8[%c0_17, %c0_18, %c0_19] : memref<1x16x512xf32, #tpu.memory_space<vmem>>, vector<1x16x512xf32>
    %19 = vector.shape_cast %18 : vector<1x16x512xf32> to vector<16x512xf32>
    %20 = vector.shape_cast %17 : vector<16x512xf32> to vector<1x16x512xf32>
    tpu.vector_store %arg8[%c0_17, %c0_18, %c0_19], %20 {strides = array<i32>} : memref<1x16x512xf32, #tpu.memory_space<vmem>>, vector<1x16x512xf32>,
    return
  }
  func.func @transform_0(%arg0: i32, %arg1: i32) -> (i32, i32, i32, i32) {
    %c0_i32 = arith.constant 0 : i32
    %c0_i32_0 = arith.constant 0 : i32
    %c0_i32_1 = arith.constant 0 : i32
    return %arg0, %c0_i32, %c0_i32_0, %arg1 : i32, i32, i32, i32
  }
  func.func @transform_1(%arg0: i32, %arg1: i32) -> (i32, i32, i32) {
    %c0_i32 = arith.constant 0 : i32
    %c0_i32_0 = arith.constant 0 : i32
    return %arg0, %c0_i32, %arg1 : i32, i32, i32
  }
  func.func @transform_2(%arg0: i32, %arg1: i32) -> (i32, i32) {
    %c0_i32 = arith.constant 0 : i32
    %c0_i32_0 = arith.constant 0 : i32
    %c0_i32_1 = arith.constant 0 : i32
    return %c0_i32, %c0_i32_0 : i32, i32
  }
  func.func @transform_3(%arg0: i32, %arg1: i32) -> (i32, i32) {
    %c0_i32 = arith.constant 0 : i32
    %c0_i32_0 = arith.constant 0 : i32
    %c0_i32_1 = arith.constant 0 : i32
    return %c0_i32, %c0_i32_0 : i32, i32
  }
  func.func @transform_4(%arg0: i32, %arg1: i32) -> (i32, i32) {
    %c0_i32 = arith.constant 0 : i32
    %c0_i32_0 = arith.constant 0 : i32
    %c0_i32_1 = arith.constant 0 : i32
    return %c0_i32, %c0_i32_0 : i32, i32
  }
  func.func @transform_5(%arg0: i32, %arg1: i32) -> (i32, i32) {
    %c0_i32 = arith.constant 0 : i32
    %c0_i32_0 = arith.constant 0 : i32
    %c0_i32_1 = arith.constant 0 : i32
    return %c0_i32, %c0_i32_0 : i32, i32
  }
  func.func @transform_6(%arg0: i32, %arg1: i32) -> (i32, i32, i32) {
    %c0_i32 = arith.constant 0 : i32
    %c0_i32_0 = arith.constant 0 : i32
    return %arg0, %c0_i32, %arg1 : i32, i32, i32
  }
}

</mosaic_0001>

<llo_original>
// kernel: bottleneck_forward.2
$region0: #{bottleneck_forward.2}
  #allocation0 [shape = 'u32[]', space=smem, size = 0x4, offset = 0x4, fixed_abs, tag = 'smem constant byte address 0x4 - core index']
  #allocation1 [shape = 'u32[144,128]{1,0:T(1,128)}', space=vmem, size = 0x12000, scoped, tag = 'internal scratch']
  %s0 = inlined_call_operand.hbm [shape: f32[2,8,512], index: 0, kind: input, shape index: {}]
  %s1 = inlined_call_operand.hbm [shape: f32[8,8], index: 1, kind: input, shape index: {}]
  %s2 = inlined_call_operand.vmem [shape: f32[8,1], index: 2, kind: input, shape index: {}]
  %s3 = inlined_call_operand.vmem [shape: f32[2,8,512], index: 3, kind: output, shape index: {}]
  %s4 = sld [smem:[#allocation0]]
  $region53: #{bottleneck_forward.2} parent=0
    _
  %s6 = ssub.s32 1, %s4
  %s7 = scalar_select 0, %s6, %s4
  $region1: #{bottleneck_forward.2} parent=0
    #allocation2 [shape = 'u8[32768]{0}', space=vmem, size = 0x8000, scoped, tag = 'input window, operand 0']
    #allocation3 [shape = 's32[2]{0}', space=sflag, size = 0x8, scoped, tag = 'scoped memory for bottleneck_forward.2']
    #allocation4 [shape = 'u8[4096]{0}', space=vmem, size = 0x1000, scoped, tag = 'input window, operand 1, single buffered']
    #allocation5 [shape = 's32[1]{0}', space=sflag, size = 0x4, scoped, tag = 'scoped memory for bottleneck_forward.2']
    %8 = vsyncpa [#allocation3], 0
    %s9 = scalar_lea.sflag [#allocation3], 1
    %10 = vsyncpa %s9, 0
    %11 = vsyncpa [#allocation5], 0
    loop: start=0, step=1, limit=4
    $region2: #{bottleneck_forward.2} parent=1 // loop_pre_header
      _
    $region3: #{bottleneck_forward.2} parent=1 // loop_header
      %s13 = sphi 0, %s17
      %p14 = scmp.ge.s32.totalorder %s13, 4
      %s20 = sphi 0, %s32
      %s21 = sphi 0, %s28
      %s22 = sphi 0, %s20
      %s23 = sphi 0, %s21
      %s24 = sphi 0, %s22
      %s25 = sphi 0, %s23
      %s37 = sphi 0, %s39
      %s40 = sphi 0, %s37
      %s41 = sphi 0, %s40
      %s57 = sphi 0, %s41
      %s61 = sphi 0, %s61
      %s63 = sphi 0, %s61
      %s64 = sphi 0, %s63
      %s78 = sphi 0, %s64
      %s82 = sphi 0, %s82
      %s84 = sphi 0, %s82
      %s85 = sphi 0, %s84
      %s99 = sphi 0, %s85
      %s107 = sphi 0, %s109
      %s110 = sphi 0, %s107
      %s111 = sphi 0, %s110
      %s127 = sphi 0, %s111
    $region4: #{bottleneck_forward.2} parent=1 // loop_header_branch
      %16 = sbr.rel (%p14) target = $region8
    $region5: #{bottleneck_forward.2} parent=1 // loop_body
      %s18 = ssub.s32 %s13, 1
      %s19 = ssub.s32 %s13, 2
      %s26 = sadd.s32 1, %s21
      %p27 = scmp.ge.s32.totalorder %s26, 1
      %s28 = scalar_select %p27, 0, %s26
      %s29 = sadd.s32 1, %s20
      %s30 = scalar_select %p27, %s29, %s20
      %p31 = scmp.ge.s32.totalorder %s30, 2
      %s32 = scalar_select %p31, 0, %s30
      %s33 = ssub.s32 %s20, %s32
      %s34 = ssub.s32 %s21, %s28
      %s35 = sor.u32 %s33, %s34
      %p36 = scmp.eq.s32.totalorder %s35, 0
      %s38 = sadd.s32 %s37, 1
      %s39 = scalar_select %p36, %s37, %s38
      %p42 = pneg %p36
      %p43 = scmp.eq.s32.totalorder %s13, 1
      %p44 = por %p42, %p43
      %p45 = scmp.ne.s32.totalorder %s37, %s40
      %p46 = scmp.eq.s32.totalorder %s13, 0
      %p47 = por %p45, %p46
      %p48 = scmp.ne.s32.totalorder %s37, %s40
      %p49 = scmp.eq.s32.totalorder %s18, 1
      %p50 = por %p48, %p49
      %p51 = scmp.ne.s32.totalorder %s40, %s41
      %p52 = scmp.eq.s32.totalorder %s18, 0
      %p53 = por %p51, %p52
      %p54 = scmp.ne.s32.totalorder %s40, %s41
      %p55 = scmp.eq.s32.totalorder %s19, 1
      %p56 = por %p54, %p55
      %p58 = scmp.ne.s32.totalorder %s41, %s57
      %p59 = scmp.eq.s32.totalorder %s19, 0
      %p60 = por %p58, %p59
      %s62 = sadd.s32 %s61, 1
      %p65 = scmp.eq.s32.totalorder %s13, 1
      %p66 = scmp.ne.s32.totalorder %s61, %s63
      %p67 = scmp.eq.s32.totalorder %s13, 0
      %p68 = por %p66, %p67
      %p69 = scmp.ne.s32.totalorder %s61, %s63
      %p70 = scmp.eq.s32.totalorder %s18, 1
      %p71 = por %p69, %p70
      %p72 = scmp.ne.s32.totalorder %s63, %s64
      %p73 = scmp.eq.s32.totalorder %s18, 0
      %p74 = por %p72, %p73
      %p75 = scmp.ne.s32.totalorder %s63, %s64
      %p76 = scmp.eq.s32.totalorder %s19, 1
      %p77 = por %p75, %p76
      %p79 = scmp.ne.s32.totalorder %s64, %s78
      %p80 = scmp.eq.s32.totalorder %s19, 0
      %p81 = por %p79, %p80
      %s83 = sadd.s32 %s82, 1
      %p86 = scmp.eq.s32.totalorder %s13, 1
      %p87 = scmp.ne.s32.totalorder %s82, %s84
      %p88 = scmp.eq.s32.totalorder %s13, 0
      %p89 = por %p87, %p88
      %p90 = scmp.ne.s32.totalorder %s82, %s84
      %p91 = scmp.eq.s32.totalorder %s18, 1
      %p92 = por %p90, %p91
      %p93 = scmp.ne.s32.totalorder %s84, %s85
      %p94 = scmp.eq.s32.totalorder %s18, 0
      %p95 = por %p93, %p94
      %p96 = scmp.ne.s32.totalorder %s84, %s85
      %p97 = scmp.eq.s32.totalorder %s19, 1
      %p98 = por %p96, %p97
      %p100 = scmp.ne.s32.totalorder %s85, %s99
      %p101 = scmp.eq.s32.totalorder %s19, 0
      %p102 = por %p100, %p101
      %s103 = ssub.s32 %s20, %s32
      %s104 = ssub.s32 %s21, %s28
      %s105 = sor.u32 %s103, %s104
      %p106 = scmp.eq.s32.totalorder %s105, 0
      %s108 = sadd.s32 %s107, 1
      %s109 = scalar_select %p106, %s107, %s108
      %p112 = pneg %p106
      %p113 = scmp.eq.s32.totalorder %s13, 1
      %p114 = por %p112, %p113
      %p115 = scmp.ne.s32.totalorder %s107, %s110
      %p116 = scmp.eq.s32.totalorder %s13, 0
      %p117 = por %p115, %p116
      %p118 = scmp.ne.s32.totalorder %s107, %s110
      %p119 = scmp.eq.s32.totalorder %s18, 1
      %p120 = por %p118, %p119
      %p121 = scmp.ne.s32.totalorder %s110, %s111
      %p122 = scmp.eq.s32.totalorder %s18, 0
      %p123 = por %p121, %p122
      %p124 = scmp.ne.s32.totalorder %s110, %s111
      %p125 = scmp.eq.s32.totalorder %s19, 1
      %p126 = por %p124, %p125
      %p128 = scmp.ne.s32.totalorder %s111, %s127
      %p129 = scmp.eq.s32.totalorder %s19, 0
      %p130 = por %p128, %p129
      %p131 = scmp.le.s32.totalorder 1, %s13
      %p132 = scmp.lt.s32.totalorder %s13, 3
      %p133 = pnand %p131, %p132
      %p134 = pneg %p133
      // Predicated region
      $region9: #{bottleneck_forward.2} parent=5 // pred_check
        _
      $region10: #{bottleneck_forward.2} parent=5 // pred_check_branch
        %136 = sbr.rel (%p133) target = $region12
      $region11: #{bottleneck_forward.2} parent=5 // pred_region
        %s137 = ssub.s32 %s13, 1
        // Predicated region
        $region13: #{bottleneck_forward.2} parent=11 // pred_check
          %p138 = pneg %p74
        $region14: #{bottleneck_forward.2} parent=11 // pred_check_branch
          %140 = sbr.rel (%p138) target = $region16
        $region15: #{bottleneck_forward.2} parent=11 // pred_region
          %s142 = ssub.s32 128, 128
          %143 = vsyncadd [#allocation5], %s142
          %s145 = sshll.u32 [#allocation4], 4
          %s146 = int_to_ptr.vmem [resolvable:$true] %s145
          %148 = dma.hbm_to_vmem [thread:$0]  %s1, 128, %s146, [#allocation5]
        $region16: #{bottleneck_forward.2} parent=11 // pred_fallthru
          _
        // Predicated region
        $region17: #{bottleneck_forward.2} parent=11 // pred_check
          %p149 = pneg %p95
        $region18: #{bottleneck_forward.2} parent=11 // pred_check_branch
          %151 = sbr.rel (%p149) target = $region20
        $region19: #{bottleneck_forward.2} parent=11 // pred_region
          _
        $region20: #{bottleneck_forward.2} parent=11 // pred_fallthru
          _
      $region12: #{bottleneck_forward.2} parent=5 // pred_fallthru
        _
      %p152 = scmp.lt.s32.totalorder %s13, 2
      // Predicated region
      $region21: #{bottleneck_forward.2} parent=5 // pred_check
        %p153 = pneg %p152
      $region22: #{bottleneck_forward.2} parent=5 // pred_check_branch
        %155 = sbr.rel (%p153) target = $region24
      $region23: #{bottleneck_forward.2} parent=5 // pred_region
        // Predicated region
        $region25: #{bottleneck_forward.2} parent=23 // pred_check
          %p156 = pneg %p47
        $region26: #{bottleneck_forward.2} parent=23 // pred_check_branch
          %158 = sbr.rel (%p156) target = $region28
        $region27: #{bottleneck_forward.2} parent=23 // pred_region
          %s159 = sand.u32 %s37, 1
          %s160 = scalar_lea.sflag [#allocation3], %s159
          %s161 = sand.u32 %s37, 1
          %s162 = smul.addr %s161, 32
          %s163 = scalar_lea.vmem [#allocation2], %s162
          %s164 = smul.u32 4, %s21
          %s166 = ssub.s32 512, 512
          %167 = vsyncadd %s160, %s166
          %s168 = smul.addr %s20, 4
          %s169 = sadd.s32 %s164, %s168
          %s170 = smul.addr %s169, 128
          %s171 = scalar_lea.hbm %s0, %s170
          %s173 = sshll.u32 %s163, 4
          %s174 = int_to_ptr.vmem [resolvable:$true] %s173
          %176 = dma.hbm_to_vmem [thread:$0]  %s171, 512, %s174, %s160
        $region28: #{bottleneck_forward.2} parent=23 // pred_fallthru
          _
      $region24: #{bottleneck_forward.2} parent=5 // pred_fallthru
        _
      %p177 = scmp.le.s32.totalorder 1, %s13
      %p178 = scmp.lt.s32.totalorder %s13, 3
      %p179 = pnand %p177, %p178
      %p180 = pneg %p179
      // Predicated region
      $region29: #{bottleneck_forward.2} parent=5 // pred_check
        _
      $region30: #{bottleneck_forward.2} parent=5 // pred_check_branch
        %182 = sbr.rel (%p179) target = $region32
      $region31: #{bottleneck_forward.2} parent=5 // pred_region
        %s183 = ssub.s32 %s13, 1
        %s184 = sand.u32 %s40, 1
        %s185 = scalar_lea.sflag [#allocation3], %s184
        %s186 = sand.u32 %s40, 1
        %s187 = smul.addr %s186, 32
        %s188 = scalar_lea.vmem [#allocation2], %s187
        // Predicated region
        $region33: #{bottleneck_forward.2} parent=31 // pred_check
          %p189 = pneg %p53
        $region34: #{bottleneck_forward.2} parent=31 // pred_check_branch
          %191 = sbr.rel (%p189) target = $region36
        $region35: #{bottleneck_forward.2} parent=31 // pred_region
          %192 = dma.done %s185, 512
        $region36: #{bottleneck_forward.2} parent=31 // pred_fallthru
          _
        // Predicated region
        $region37: #{bottleneck_forward.2} parent=31 // pred_check
          %p193 = pneg %p74
        $region38: #{bottleneck_forward.2} parent=31 // pred_check_branch
          %195 = sbr.rel (%p193) target = $region40
        $region39: #{bottleneck_forward.2} parent=31 // pred_region
          %196 = dma.done [#allocation5], 128
        $region40: #{bottleneck_forward.2} parent=31 // pred_fallthru
          _
        %s197 = sand.u32 %s40, 1
        %s198 = scalar_lea.sflag [#allocation3], %s197
        %s199 = sand.u32 %s40, 1
        %s200 = smul.addr %s199, 32
        %s201 = scalar_lea.vmem [#allocation2], %s200
        %p202 = pneg %p53
        %p203 = pneg %p50
        %p204 = pneg %p74
        %p205 = pneg %p71
        %p206 = pneg %p95
        %p207 = pneg %p92
        %p208 = pneg %p123
        %p209 = pneg %p120
        %s210 = smul.u32 4, %s23
        %p211 = scmp.lt.s32.totalorder %s22, 1
        %s212 = scalar_select %p211, %s22, 1
        %p213 = scmp.lt.s32.totalorder %s210, 3
        %s214 = scalar_select %p213, %s210, 3
        %s215 = smul.addr %s212, 4
        %s216 = sadd.s32 %s214, %s215
        %s217 = smul.addr %s216, 8
        %s218 = scalar_lea.vmem %s3, %s217
        %s219 = smul.u32 4, %s23
        %s220 = smul.u32 4, %s23
        %p221 = scmp.lt.s32.totalorder %s22, 1
        %s222 = scalar_select %p221, %s22, 1
        %p223 = scmp.lt.s32.totalorder %s220, 3
        %s224 = scalar_select %p223, %s220, 3
        %s225 = smul.addr %s222, 4
        %s226 = sadd.s32 %s224, %s225
        %s227 = smul.addr %s226, 8
        %s228 = scalar_lea.vmem %s3, %s227
        %s229 = smul.u32 4, %s23
        %v230 = vld [vmem:[#allocation4] sm:$0xff]
        %v231 = vld [vmem:[%s188] sm:$0xff]
        %v232 = vld [vmem:[%s188 + $0x8] sm:$0xff]
        %v233 = vld [vmem:[%s188 + $0x10] sm:$0xff]
        %v234 = vld [vmem:[%s188 + $0x18] sm:$0xff]
        %v235 = vld [vmem:[%s2] sm:$0xff]
        %237 = vset.pattern.permute.xlu0 0
        %238 = vperm.xlu0 %237, %v235
        %v239 = vpop.permute.xlu0 %238
        %vm241 = vcmask 64512
        %v243 = vsel %vm241, %v230, 0
        %245 = vmatprep.subr.mxu0 0.0
        %246 = vmatpush1.msra.mxu0 0.0
        %247 = vmatprep.subr.mxu0 0.0
        %248 = vmatpush1.msra.mxu0 0.0
        %249 = vmatprep.subr.mxu0 0.0
        %250 = vmatpush1.msra.mxu0 0.0
        %251 = vmatprep.subr.mxu0 0.0
        %252 = vmatpush1.msra.mxu0 0.0
        %253 = vmatprep.subr.mxu0 0.0
        %254 = vmatpush1.msra.mxu0 0.0
        %255 = vmatprep.subr.mxu0 0.0
        %256 = vmatpush1.msra.mxu0 0.0
        %257 = vmatprep.subr.mxu0 0.0
        %258 = vmatpush1.msra.mxu0 0.0
        %259 = vmatprep.subr.mxu0 0.0
        %260 = vmatpush1.msra.mxu0 0.0
        %261 = vmatprep.subr.mxu0 0.0
        %262 = vmatpush1.msra.mxu0 0.0
        %263 = vmatprep.subr.mxu0 0.0
        %264 = vmatpush1.msra.mxu0 0.0
        %265 = vmatprep.subr.mxu0 0.0
        %266 = vmatpush1.msra.mxu0 0.0
        %267 = vmatprep.subr.mxu0 0.0
        %268 = vmatpush1.msra.mxu0 0.0
        %269 = vmatprep.subr.mxu0 0.0
        %270 = vmatpush1.msra.mxu0 0.0
        %271 = vmatprep.subr.mxu0 0.0
        %272 = vmatpush1.msra.mxu0 0.0
        %273 = vmatprep.subr.mxu0 0.0
        %274 = vmatpush1.msra.mxu0 0.0
        %275 = vmatprep.subr.mxu0 %v232
        %276 = vmatpush1.msra.mxu0 %v231
        %277 = vmatprep.subr.mxu0 0.0
        %278 = vmatpush2.msra.mxu0 0.0
        %279 = vmatprep.subr.mxu0 0.0
        %280 = vmatpush2.msra.mxu0 0.0
        %281 = vmatprep.subr.mxu0 0.0
        %282 = vmatpush2.msra.mxu0 0.0
        %283 = vmatprep.subr.mxu0 0.0
        %284 = vmatpush2.msra.mxu0 0.0
        %285 = vmatprep.subr.mxu0 0.0
        %286 = vmatpush2.msra.mxu0 0.0
        %287 = vmatprep.subr.mxu0 0.0
        %288 = vmatpush2.msra.mxu0 0.0
        %289 = vmatprep.subr.mxu0 0.0
        %290 = vmatpush2.msra.mxu0 0.0
        %291 = vmatprep.subr.mxu0 0.0
        %292 = vmatpush2.msra.mxu0 0.0
        %293 = vmatprep.subr.mxu0 0.0
        %294 = vmatpush2.msra.mxu0 0.0
        %295 = vmatprep.subr.mxu0 0.0
        %296 = vmatpush2.msra.mxu0 0.0
        %297 = vmatprep.subr.mxu0 0.0
        %298 = vmatpush2.msra.mxu0 0.0
        %299 = vmatprep.subr.mxu0 0.0
        %300 = vmatpush2.msra.mxu0 0.0
        %301 = vmatprep.subr.mxu0 0.0
        %302 = vmatpush2.msra.mxu0 0.0
        %303 = vmatprep.subr.mxu0 0.0
        %304 = vmatpush2.msra.mxu0 0.0
        %305 = vmatprep.subr.mxu0 0.0
        %306 = vmatpush2.msra.mxu0 0.0
        %307 = vmatprep.subr.mxu0 0.0
        %308 = vmatpush2.msra.mxu0 0.0
        %309 = vmatprep.mubr.f32.mxu0 0.0
        %310 = vmatmul.mubr.f32.gmra.mxu0 %v243
        %v311 = vpop.f32.mrf.mxu0
        %v312 = vadd.f32 %v239, %v311
        %v313 = vpop.f32.mrf.mxu0
        %v314 = vadd.f32 %v239, %v313
        %315 = vdwg.mxu0
        %316 = vmatprep.subr.mxu0 0.0
        %317 = vmatpush1.msra.mxu0 0.0
        %318 = vmatprep.subr.mxu0 0.0
        %319 = vmatpush1.msra.mxu0 0.0
        %320 = vmatprep.subr.mxu0 0.0
        %321 = vmatpush1.msra.mxu0 0.0
        %322 = vmatprep.subr.mxu0 0.0
        %323 = vmatpush1.msra.mxu0 0.0
        %324 = vmatprep.subr.mxu0 0.0
        %325 = vmatpush1.msra.mxu0 0.0
        %326 = vmatprep.subr.mxu0 0.0
        %327 = vmatpush1.msra.mxu0 0.0
        %328 = vmatprep.subr.mxu0 0.0
        %329 = vmatpush1.msra.mxu0 0.0
        %330 = vmatprep.subr.mxu0 0.0
        %331 = vmatpush1.msra.mxu0 0.0
        %332 = vmatprep.subr.mxu0 0.0
        %333 = vmatpush1.msra.mxu0 0.0
        %334 = vmatprep.subr.mxu0 0.0
        %335 = vmatpush1.msra.mxu0 0.0
        %336 = vmatprep.subr.mxu0 0.0
        %337 = vmatpush1.msra.mxu0 0.0
        %338 = vmatprep.subr.mxu0 0.0
        %339 = vmatpush1.msra.mxu0 0.0
        %340 = vmatprep.subr.mxu0 0.0
        %341 = vmatpush1.msra.mxu0 0.0
        %342 = vmatprep.subr.mxu0 0.0
        %343 = vmatpush1.msra.mxu0 0.0
        %344 = vmatprep.subr.mxu0 0.0
        %345 = vmatpush1.msra.mxu0 0.0
        %346 = vmatprep.subr.mxu0 %v234
        %347 = vmatpush1.msra.mxu0 %v233
        %348 = vmatprep.subr.mxu0 0.0
        %349 = vmatpush2.msra.mxu0 0.0
        %350 = vmatprep.subr.mxu0 0.0
        %351 = vmatpush2.msra.mxu0 0.0
        %352 = vmatprep.subr.mxu0 0.0
        %353 = vmatpush2.msra.mxu0 0.0
        %354 = vmatprep.subr.mxu0 0.0
        %355 = vmatpush2.msra.mxu0 0.0
        %356 = vmatprep.subr.mxu0 0.0
        %357 = vmatpush2.msra.mxu0 0.0
        %358 = vmatprep.subr.mxu0 0.0
        %359 = vmatpush2.msra.mxu0 0.0
        %360 = vmatprep.subr.mxu0 0.0
        %361 = vmatpush2.msra.mxu0 0.0
        %362 = vmatprep.subr.mxu0 0.0
        %363 = vmatpush2.msra.mxu0 0.0
        %364 = vmatprep.subr.mxu0 0.0
        %365 = vmatpush2.msra.mxu0 0.0
        %366 = vmatprep.subr.mxu0 0.0
        %367 = vmatpush2.msra.mxu0 0.0
        %368 = vmatprep.subr.mxu0 0.0
        %369 = vmatpush2.msra.mxu0 0.0
        %370 = vmatprep.subr.mxu0 0.0
        %371 = vmatpush2.msra.mxu0 0.0
        %372 = vmatprep.subr.mxu0 0.0
        %373 = vmatpush2.msra.mxu0 0.0
        %374 = vmatprep.subr.mxu0 0.0
        %375 = vmatpush2.msra.mxu0 0.0
        %376 = vmatprep.subr.mxu0 0.0
        %377 = vmatpush2.msra.mxu0 0.0
        %378 = vmatprep.subr.mxu0 0.0
        %379 = vmatpush2.msra.mxu0 0.0
        %380 = vmatprep.mubr.f32.mxu0 0.0
        %381 = vmatmul.mubr.f32.gmra.mxu0 %v243
        %v382 = vpop.f32.mrf.mxu0
        %v383 = vadd.f32 %v239, %v382
        %v384 = vpop.f32.mrf.mxu0
        %v385 = vadd.f32 %v239, %v384
        %386 = vdwg.mxu0
        %v387 = vmax.f32 %v312, 0.0
        %v388 = vmax.f32 %v314, 0.0
        %v389 = vmax.f32 %v383, 0.0
        %v390 = vmax.f32 %v385, 0.0
        %391 = vst [vmem:[%s228] sm:$0xff] %v387
        %392 = vst [vmem:[%s228 + $0x8] sm:$0xff] %v388
        %393 = vst [vmem:[%s228 + $0x10] sm:$0xff] %v389
        %394 = vst [vmem:[%s228 + $0x18] sm:$0xff] %v390
        %s395 = smul.u32 4, %s23
        %p396 = scmp.lt.s32.totalorder %s22, 1
        %s397 = scalar_select %p396, %s22, 1
        %p398 = scmp.lt.s32.totalorder %s395, 3
        %s399 = scalar_select %p398, %s395, 3
        %s400 = smul.addr %s397, 4
        %s401 = sadd.s32 %s399, %s400
        %s402 = smul.addr %s401, 8
        %s403 = scalar_lea.vmem %s3, %s402
        // Predicated region
        $region41: #{bottleneck_forward.2} parent=31 // pred_check
          %p404 = pneg %p120
        $region42: #{bottleneck_forward.2} parent=31 // pred_check_branch
          %406 = sbr.rel (%p404) target = $region44
        $region43: #{bottleneck_forward.2} parent=31 // pred_region
          %s407 = smul.u32 4, %s23
        $region44: #{bottleneck_forward.2} parent=31 // pred_fallthru
          _
      $region32: #{bottleneck_forward.2} parent=5 // pred_fallthru
        _
      %p408 = scmp.le.s32.totalorder 2, %s13
      // Predicated region
      $region45: #{bottleneck_forward.2} parent=5 // pred_check
        %p409 = pneg %p408
      $region46: #{bottleneck_forward.2} parent=5 // pred_check_branch
        %411 = sbr.rel (%p409) target = $region48
      $region47: #{bottleneck_forward.2} parent=5 // pred_region
        %s412 = ssub.s32 %s13, 2
        // Predicated region
        $region49: #{bottleneck_forward.2} parent=47 // pred_check
          %p413 = pneg %p126
        $region50: #{bottleneck_forward.2} parent=47 // pred_check_branch
          %415 = sbr.rel (%p413) target = $region52
        $region51: #{bottleneck_forward.2} parent=47 // pred_region
          %s416 = smul.u32 4, %s25
          %p417 = scmp.lt.s32.totalorder %s24, 1
          %s418 = scalar_select %p417, %s24, 1
          %p419 = scmp.lt.s32.totalorder %s416, 3
          %s420 = scalar_select %p419, %s416, 3
          %s421 = smul.addr %s418, 4
          %s422 = sadd.s32 %s420, %s421
          %s423 = smul.addr %s422, 8
          %s424 = scalar_lea.vmem %s3, %s423
        $region52: #{bottleneck_forward.2} parent=47 // pred_fallthru
          _
      $region48: #{bottleneck_forward.2} parent=5 // pred_fallthru
        _
    $region6: #{bottleneck_forward.2} parent=1 // loop_footer
      %s17 = sadd.s32 1, %s13
    $region7: #{bottleneck_forward.2} parent=1 // loop_footer_branch
      %12 = sbr.rel target = $region3
    $region8: #{bottleneck_forward.2} parent=1 // loop_exit
      _
    %425 = vsyncpa [#allocation3], 1
    %s426 = scalar_lea.sflag [#allocation3], 1
    %427 = vsyncpa %s426, 1
    %428 = vsyncpa [#allocation5], 1

// kernel: bottleneck_forward.3
$region0: #{bottleneck_forward.3}
  #allocation0 [shape = 'u32[]', space=smem, size = 0x4, offset = 0x4, fixed_abs, tag = 'smem constant byte address 0x4 - core index']
  #allocation1 [shape = 'u32[144,128]{1,0:T(1,128)}', space=vmem, size = 0x12000, scoped, tag = 'internal scratch']
  %s0 = inlined_call_operand.vmem [shape: f32[2,8,8,512], index: 0, kind: input, shape index: {}]
  %s1 = inlined_call_operand.vmem [shape: f32[2,8,512], index: 1, kind: input, shape index: {}]
  %s2 = inlined_call_operand.vmem [shape: f32[16,8], index: 2, kind: input, shape index: {}]
  %s3 = inlined_call_operand.vmem [shape: f32[16,1], index: 3, kind: input, shape index: {}]
  %s4 = inlined_call_operand.vmem [shape: f32[16,8], index: 4, kind: input, shape index: {}]
  %s5 = inlined_call_operand.vmem [shape: f32[16,1], index: 5, kind: input, shape index: {}]
  %s6 = inlined_call_operand.hbm [shape: f32[2,16,512], index: 6, kind: output, shape index: {}]
  %s7 = sld [smem:[#allocation0]]
  $region57: #{bottleneck_forward.3} parent=0
    _
  %s9 = ssub.s32 1, %s7
  %s10 = scalar_select 0, %s9, %s7
  $region1: #{bottleneck_forward.3} parent=0
    #allocation2 [shape = 'u8[65536]{0}', space=vmem, size = 0x10000, scoped, tag = 'output window, operand 0']
    #allocation3 [shape = 's32[2]{0}', space=sflag, size = 0x8, scoped, tag = 'scoped memory for bottleneck_forward.3']
    %11 = vsyncpa [#allocation3], 0
    %s12 = scalar_lea.sflag [#allocation3], 1
    %13 = vsyncpa %s12, 0
    loop: start=0, step=1, limit=4
    $region2: #{bottleneck_forward.3} parent=1 // loop_pre_header
      _
    $region3: #{bottleneck_forward.3} parent=1 // loop_header
      %s15 = sphi 0, %s19
      %p16 = scmp.ge.s32.totalorder %s15, 4
      %s22 = sphi 0, %s34
      %s23 = sphi 0, %s30
      %s24 = sphi 0, %s22
      %s25 = sphi 0, %s23
      %s26 = sphi 0, %s24
      %s27 = sphi 0, %s25
      %s39 = sphi 0, %s41
      %s42 = sphi 0, %s39
      %s43 = sphi 0, %s42
      %s59 = sphi 0, %s43
      %s67 = sphi 0, %s69
      %s70 = sphi 0, %s67
      %s71 = sphi 0, %s70
      %s87 = sphi 0, %s71
      %s91 = sphi 0, %s91
      %s93 = sphi 0, %s91
      %s94 = sphi 0, %s93
      %s108 = sphi 0, %s94
      %s112 = sphi 0, %s112
      %s114 = sphi 0, %s112
      %s115 = sphi 0, %s114
      %s129 = sphi 0, %s115
      %s133 = sphi 0, %s133
      %s135 = sphi 0, %s133
      %s136 = sphi 0, %s135
      %s150 = sphi 0, %s136
      %s154 = sphi 0, %s154
      %s156 = sphi 0, %s154
      %s157 = sphi 0, %s156
      %s171 = sphi 0, %s157
      %s179 = sphi 0, %s181
      %s182 = sphi 0, %s179
      %s183 = sphi 0, %s182
      %s199 = sphi 0, %s183
    $region4: #{bottleneck_forward.3} parent=1 // loop_header_branch
      %18 = sbr.rel (%p16) target = $region8
    $region5: #{bottleneck_forward.3} parent=1 // loop_body
      %s20 = ssub.s32 %s15, 1
      %s21 = ssub.s32 %s15, 2
      %s28 = sadd.s32 1, %s23
      %p29 = scmp.ge.s32.totalorder %s28, 1
      %s30 = scalar_select %p29, 0, %s28
      %s31 = sadd.s32 1, %s22
      %s32 = scalar_select %p29, %s31, %s22
      %p33 = scmp.ge.s32.totalorder %s32, 2
      %s34 = scalar_select %p33, 0, %s32
      %s35 = ssub.s32 %s22, %s34
      %s36 = ssub.s32 %s23, %s30
      %s37 = sor.u32 %s35, %s36
      %p38 = scmp.eq.s32.totalorder %s37, 0
      %s40 = sadd.s32 %s39, 1
      %s41 = scalar_select %p38, %s39, %s40
      %p44 = pneg %p38
      %p45 = scmp.eq.s32.totalorder %s15, 1
      %p46 = por %p44, %p45
      %p47 = scmp.ne.s32.totalorder %s39, %s42
      %p48 = scmp.eq.s32.totalorder %s15, 0
      %p49 = por %p47, %p48
      %p50 = scmp.ne.s32.totalorder %s39, %s42
      %p51 = scmp.eq.s32.totalorder %s20, 1
      %p52 = por %p50, %p51
      %p53 = scmp.ne.s32.totalorder %s42, %s43
      %p54 = scmp.eq.s32.totalorder %s20, 0
      %p55 = por %p53, %p54
      %p56 = scmp.ne.s32.totalorder %s42, %s43
      %p57 = scmp.eq.s32.totalorder %s21, 1
      %p58 = por %p56, %p57
      %p60 = scmp.ne.s32.totalorder %s43, %s59
      %p61 = scmp.eq.s32.totalorder %s21, 0
      %p62 = por %p60, %p61
      %s63 = ssub.s32 %s22, %s34
      %s64 = ssub.s32 %s23, %s30
      %s65 = sor.u32 %s63, %s64
      %p66 = scmp.eq.s32.totalorder %s65, 0
      %s68 = sadd.s32 %s67, 1
      %s69 = scalar_select %p66, %s67, %s68
      %p72 = pneg %p66
      %p73 = scmp.eq.s32.totalorder %s15, 1
      %p74 = por %p72, %p73
      %p75 = scmp.ne.s32.totalorder %s67, %s70
      %p76 = scmp.eq.s32.totalorder %s15, 0
      %p77 = por %p75, %p76
      %p78 = scmp.ne.s32.totalorder %s67, %s70
      %p79 = scmp.eq.s32.totalorder %s20, 1
      %p80 = por %p78, %p79
      %p81 = scmp.ne.s32.totalorder %s70, %s71
      %p82 = scmp.eq.s32.totalorder %s20, 0
      %p83 = por %p81, %p82
      %p84 = scmp.ne.s32.totalorder %s70, %s71
      %p85 = scmp.eq.s32.totalorder %s21, 1
      %p86 = por %p84, %p85
      %p88 = scmp.ne.s32.totalorder %s71, %s87
      %p89 = scmp.eq.s32.totalorder %s21, 0
      %p90 = por %p88, %p89
      %s92 = sadd.s32 %s91, 1
      %p95 = scmp.eq.s32.totalorder %s15, 1
      %p96 = scmp.ne.s32.totalorder %s91, %s93
      %p97 = scmp.eq.s32.totalorder %s15, 0
      %p98 = por %p96, %p97
      %p99 = scmp.ne.s32.totalorder %s91, %s93
      %p100 = scmp.eq.s32.totalorder %s20, 1
      %p101 = por %p99, %p100
      %p102 = scmp.ne.s32.totalorder %s93, %s94
      %p103 = scmp.eq.s32.totalorder %s20, 0
      %p104 = por %p102, %p103
      %p105 = scmp.ne.s32.totalorder %s93, %s94
      %p106 = scmp.eq.s32.totalorder %s21, 1
      %p107 = por %p105, %p106
      %p109 = scmp.ne.s32.totalorder %s94, %s108
      %p110 = scmp.eq.s32.totalorder %s21, 0
      %p111 = por %p109, %p110
      %s113 = sadd.s32 %s112, 1
      %p116 = scmp.eq.s32.totalorder %s15, 1
      %p117 = scmp.ne.s32.totalorder %s112, %s114
      %p118 = scmp.eq.s32.totalorder %s15, 0
      %p119 = por %p117, %p118
      %p120 = scmp.ne.s32.totalorder %s112, %s114
      %p121 = scmp.eq.s32.totalorder %s20, 1
      %p122 = por %p120, %p121
      %p123 = scmp.ne.s32.totalorder %s114, %s115
      %p124 = scmp.eq.s32.totalorder %s20, 0
      %p125 = por %p123, %p124
      %p126 = scmp.ne.s32.totalorder %s114, %s115
      %p127 = scmp.eq.s32.totalorder %s21, 1
      %p128 = por %p126, %p127
      %p130 = scmp.ne.s32.totalorder %s115, %s129
      %p131 = scmp.eq.s32.totalorder %s21, 0
      %p132 = por %p130, %p131
      %s134 = sadd.s32 %s133, 1
      %p137 = scmp.eq.s32.totalorder %s15, 1
      %p138 = scmp.ne.s32.totalorder %s133, %s135
      %p139 = scmp.eq.s32.totalorder %s15, 0
      %p140 = por %p138, %p139
      %p141 = scmp.ne.s32.totalorder %s133, %s135
      %p142 = scmp.eq.s32.totalorder %s20, 1
      %p143 = por %p141, %p142
      %p144 = scmp.ne.s32.totalorder %s135, %s136
      %p145 = scmp.eq.s32.totalorder %s20, 0
      %p146 = por %p144, %p145
      %p147 = scmp.ne.s32.totalorder %s135, %s136
      %p148 = scmp.eq.s32.totalorder %s21, 1
      %p149 = por %p147, %p148
      %p151 = scmp.ne.s32.totalorder %s136, %s150
      %p152 = scmp.eq.s32.totalorder %s21, 0
      %p153 = por %p151, %p152
      %s155 = sadd.s32 %s154, 1
      %p158 = scmp.eq.s32.totalorder %s15, 1
      %p159 = scmp.ne.s32.totalorder %s154, %s156
      %p160 = scmp.eq.s32.totalorder %s15, 0
      %p161 = por %p159, %p160
      %p162 = scmp.ne.s32.totalorder %s154, %s156
      %p163 = scmp.eq.s32.totalorder %s20, 1
      %p164 = por %p162, %p163
      %p165 = scmp.ne.s32.totalorder %s156, %s157
      %p166 = scmp.eq.s32.totalorder %s20, 0
      %p167 = por %p165, %p166
      %p168 = scmp.ne.s32.totalorder %s156, %s157
      %p169 = scmp.eq.s32.totalorder %s21, 1
      %p170 = por %p168, %p169
      %p172 = scmp.ne.s32.totalorder %s157, %s171
      %p173 = scmp.eq.s32.totalorder %s21, 0
      %p174 = por %p172, %p173
      %s175 = ssub.s32 %s22, %s34
      %s176 = ssub.s32 %s23, %s30
      %s177 = sor.u32 %s175, %s176
      %p178 = scmp.eq.s32.totalorder %s177, 0
      %s180 = sadd.s32 %s179, 1
      %s181 = scalar_select %p178, %s179, %s180
      %p184 = pneg %p178
      %p185 = scmp.eq.s32.totalorder %s15, 1
      %p186 = por %p184, %p185
      %p187 = scmp.ne.s32.totalorder %s179, %s182
      %p188 = scmp.eq.s32.totalorder %s15, 0
      %p189 = por %p187, %p188
      %p190 = scmp.ne.s32.totalorder %s179, %s182
      %p191 = scmp.eq.s32.totalorder %s20, 1
      %p192 = por %p190, %p191
      %p193 = scmp.ne.s32.totalorder %s182, %s183
      %p194 = scmp.eq.s32.totalorder %s20, 0
      %p195 = por %p193, %p194
      %p196 = scmp.ne.s32.totalorder %s182, %s183
      %p197 = scmp.eq.s32.totalorder %s21, 1
      %p198 = por %p196, %p197
      %p200 = scmp.ne.s32.totalorder %s183, %s199
      %p201 = scmp.eq.s32.totalorder %s21, 0
      %p202 = por %p200, %p201
      %p203 = scmp.le.s32.totalorder 1, %s15
      %p204 = scmp.lt.s32.totalorder %s15, 3
      %p205 = pnand %p203, %p204
      %p206 = pneg %p205
      // Predicated region
      $region9: #{bottleneck_forward.3} parent=5 // pred_check
        _
      $region10: #{bottleneck_forward.3} parent=5 // pred_check_branch
        %208 = sbr.rel (%p205) target = $region12
      $region11: #{bottleneck_forward.3} parent=5 // pred_region
        %s209 = ssub.s32 %s15, 1
        // Predicated region
        $region13: #{bottleneck_forward.3} parent=11 // pred_check
          %p210 = pneg %p104
        $region14: #{bottleneck_forward.3} parent=11 // pred_check_branch
          %212 = sbr.rel (%p210) target = $region16
        $region15: #{bottleneck_forward.3} parent=11 // pred_region
          _
        $region16: #{bottleneck_forward.3} parent=11 // pred_fallthru
          _
        // Predicated region
        $region17: #{bottleneck_forward.3} parent=11 // pred_check
          %p213 = pneg %p125
        $region18: #{bottleneck_forward.3} parent=11 // pred_check_branch
          %215 = sbr.rel (%p213) target = $region20
        $region19: #{bottleneck_forward.3} parent=11 // pred_region
          _
        $region20: #{bottleneck_forward.3} parent=11 // pred_fallthru
          _
        // Predicated region
        $region21: #{bottleneck_forward.3} parent=11 // pred_check
          %p216 = pneg %p146
        $region22: #{bottleneck_forward.3} parent=11 // pred_check_branch
          %218 = sbr.rel (%p216) target = $region24
        $region23: #{bottleneck_forward.3} parent=11 // pred_region
          _
        $region24: #{bottleneck_forward.3} parent=11 // pred_fallthru
          _
        // Predicated region
        $region25: #{bottleneck_forward.3} parent=11 // pred_check
          %p219 = pneg %p167
        $region26: #{bottleneck_forward.3} parent=11 // pred_check_branch
          %221 = sbr.rel (%p219) target = $region28
        $region27: #{bottleneck_forward.3} parent=11 // pred_region
          _
        $region28: #{bottleneck_forward.3} parent=11 // pred_fallthru
          _
      $region12: #{bottleneck_forward.3} parent=5 // pred_fallthru
        _
      %p222 = scmp.lt.s32.totalorder %s15, 2
      // Predicated region
      $region29: #{bottleneck_forward.3} parent=5 // pred_check
        %p223 = pneg %p222
      $region30: #{bottleneck_forward.3} parent=5 // pred_check_branch
        %225 = sbr.rel (%p223) target = $region32
      $region31: #{bottleneck_forward.3} parent=5 // pred_region
        // Predicated region
        $region33: #{bottleneck_forward.3} parent=31 // pred_check
          %p226 = pneg %p49
        $region34: #{bottleneck_forward.3} parent=31 // pred_check_branch
          %228 = sbr.rel (%p226) target = $region36
        $region35: #{bottleneck_forward.3} parent=31 // pred_region
          %s229 = smul.u32 4, %s23
          %p230 = scmp.lt.s32.totalorder %s22, 1
          %s231 = scalar_select %p230, %s22, 1
          %p232 = scmp.lt.s32.totalorder %s229, 3
          %s233 = scalar_select %p232, %s229, 3
          %s234 = smul.addr %s231, 32
          %s235 = sadd.s32 %s233, %s234
          %s236 = smul.addr %s235, 8
          %s237 = scalar_lea.vmem %s0, %s236
          %s238 = smul.u32 4, %s23
        $region36: #{bottleneck_forward.3} parent=31 // pred_fallthru
          _
        // Predicated region
        $region37: #{bottleneck_forward.3} parent=31 // pred_check
          %p239 = pneg %p77
        $region38: #{bottleneck_forward.3} parent=31 // pred_check_branch
          %241 = sbr.rel (%p239) target = $region40
        $region39: #{bottleneck_forward.3} parent=31 // pred_region
          %s242 = smul.u32 4, %s23
          %p243 = scmp.lt.s32.totalorder %s22, 1
          %s244 = scalar_select %p243, %s22, 1
          %p245 = scmp.lt.s32.totalorder %s242, 3
          %s246 = scalar_select %p245, %s242, 3
          %s247 = smul.addr %s244, 4
          %s248 = sadd.s32 %s246, %s247
          %s249 = smul.addr %s248, 8
          %s250 = scalar_lea.vmem %s1, %s249
          %s251 = smul.u32 4, %s23
        $region40: #{bottleneck_forward.3} parent=31 // pred_fallthru
          _
      $region32: #{bottleneck_forward.3} parent=5 // pred_fallthru
        _
      %p252 = scmp.le.s32.totalorder 1, %s15
      %p253 = scmp.lt.s32.totalorder %s15, 3
      %p254 = pnand %p252, %p253
      %p255 = pneg %p254
      // Predicated region
      $region41: #{bottleneck_forward.3} parent=5 // pred_check
        _
      $region42: #{bottleneck_forward.3} parent=5 // pred_check_branch
        %257 = sbr.rel (%p254) target = $region44
      $region43: #{bottleneck_forward.3} parent=5 // pred_region
        %s258 = ssub.s32 %s15, 1
        %s259 = smul.u32 4, %s25
        %p260 = scmp.lt.s32.totalorder %s24, 1
        %s261 = scalar_select %p260, %s24, 1
        %p262 = scmp.lt.s32.totalorder %s259, 3
        %s263 = scalar_select %p262, %s259, 3
        %s264 = smul.addr %s261, 32
        %s265 = sadd.s32 %s263, %s264
        %s266 = smul.addr %s265, 8
        %s267 = scalar_lea.vmem %s0, %s266
        %p268 = pneg %p55
        %p269 = pneg %p52
        %s270 = smul.u32 4, %s25
        %p271 = scmp.lt.s32.totalorder %s24, 1
        %s272 = scalar_select %p271, %s24, 1
        %p273 = scmp.lt.s32.totalorder %s270, 3
        %s274 = scalar_select %p273, %s270, 3
        %s275 = smul.addr %s272, 4
        %s276 = sadd.s32 %s274, %s275
        %s277 = smul.addr %s276, 8
        %s278 = scalar_lea.vmem %s1, %s277
        %p279 = pneg %p83
        %p280 = pneg %p80
        %p281 = pneg %p104
        %p282 = pneg %p101
        %p283 = pneg %p125
        %p284 = pneg %p122
        %p285 = pneg %p146
        %p286 = pneg %p143
        %p287 = pneg %p167
        %p288 = pneg %p164
        %p289 = pneg %p195
        %p290 = pneg %p192
        %s291 = sand.u32 %s182, 1
        %s292 = scalar_lea.sflag [#allocation3], %s291
        %s293 = sand.u32 %s182, 1
        %s294 = smul.addr %s293, 64
        %s295 = scalar_lea.vmem [#allocation2], %s294
        %s296 = smul.u32 4, %s25
        %p297 = scmp.lt.s32.totalorder %s24, 1
        %s298 = scalar_select %p297, %s24, 1
        %p299 = scmp.lt.s32.totalorder %s296, 3
        %s300 = scalar_select %p299, %s296, 3
        %s301 = smul.addr %s298, 32
        %s302 = sadd.s32 %s300, %s301
        %s303 = smul.addr %s302, 8
        %s304 = scalar_lea.vmem %s0, %s303
        %s305 = smul.u32 4, %s25
        %s306 = smul.u32 4, %s25
        %p307 = scmp.lt.s32.totalorder %s24, 1
        %s308 = scalar_select %p307, %s24, 1
        %p309 = scmp.lt.s32.totalorder %s306, 3
        %s310 = scalar_select %p309, %s306, 3
        %s311 = smul.addr %s308, 4
        %s312 = sadd.s32 %s310, %s311
        %s313 = smul.addr %s312, 8
        %s314 = scalar_lea.vmem %s1, %s313
        %s315 = smul.u32 4, %s25
        %s316 = smul.u32 4, %s25
        %v317 = vld [vmem:[%s304] sm:$0xff]
        %v318 = vld [vmem:[%s304 + $0x8] sm:$0xff]
        %v319 = vld [vmem:[%s304 + $0x10] sm:$0xff]
        %v320 = vld [vmem:[%s304 + $0x18] sm:$0xff]
        %v321 = vld [vmem:[%s304 + $0x20] sm:$0xff]
        %v322 = vld [vmem:[%s304 + $0x28] sm:$0xff]
        %v323 = vld [vmem:[%s304 + $0x30] sm:$0xff]
        %v324 = vld [vmem:[%s304 + $0x38] sm:$0xff]
        %v325 = vld [vmem:[%s304 + $0x40] sm:$0xff]
        %v326 = vld [vmem:[%s304 + $0x48] sm:$0xff]
        %v327 = vld [vmem:[%s304 + $0x50] sm:$0xff]
        %v328 = vld [vmem:[%s304 + $0x58] sm:$0xff]
        %v329 = vld [vmem:[%s304 + $0x60] sm:$0xff]
        %v330 = vld [vmem:[%s304 + $0x68] sm:$0xff]
        %v331 = vld [vmem:[%s304 + $0x70] sm:$0xff]
        %v332 = vld [vmem:[%s304 + $0x78] sm:$0xff]
        %v333 = vld [vmem:[%s304 + $0x80] sm:$0xff]
        %v334 = vld [vmem:[%s304 + $0x88] sm:$0xff]
        %v335 = vld [vmem:[%s304 + $0x90] sm:$0xff]
        %v336 = vld [vmem:[%s304 + $0x98] sm:$0xff]
        %v337 = vld [vmem:[%s304 + $0xa0] sm:$0xff]
        %v338 = vld [vmem:[%s304 + $0xa8] sm:$0xff]
        %v339 = vld [vmem:[%s304 + $0xb0] sm:$0xff]
        %v340 = vld [vmem:[%s304 + $0xb8] sm:$0xff]
        %v341 = vld [vmem:[%s304 + $0xc0] sm:$0xff]
        %v342 = vld [vmem:[%s304 + $0xc8] sm:$0xff]
        %v343 = vld [vmem:[%s304 + $0xd0] sm:$0xff]
        %v344 = vld [vmem:[%s304 + $0xd8] sm:$0xff]
        %v345 = vld [vmem:[%s304 + $0xe0] sm:$0xff]
        %v346 = vld [vmem:[%s304 + $0xe8] sm:$0xff]
        %v347 = vld [vmem:[%s304 + $0xf0] sm:$0xff]
        %v348 = vld [vmem:[%s304 + $0xf8] sm:$0xff]
        %v349 = vmax.f32 %v317, %v321
        %v350 = vmax.f32 %v349, %v325
        %v351 = vmax.f32 %v350, %v329
        %v352 = vmax.f32 %v351, %v333
        %v353 = vmax.f32 %v352, %v337
        %v354 = vmax.f32 %v353, %v341
        %v355 = vmax.f32 %v354, %v345
        %v356 = vmax.f32 %v318, %v322
        %v357 = vmax.f32 %v356, %v326
        %v358 = vmax.f32 %v357, %v330
        %v359 = vmax.f32 %v358, %v334
        %v360 = vmax.f32 %v359, %v338
        %v361 = vmax.f32 %v360, %v342
        %v362 = vmax.f32 %v361, %v346
        %v363 = vmax.f32 %v319, %v323
        %v364 = vmax.f32 %v363, %v327
        %v365 = vmax.f32 %v364, %v331
        %v366 = vmax.f32 %v365, %v335
        %v367 = vmax.f32 %v366, %v339
        %v368 = vmax.f32 %v367, %v343
        %v369 = vmax.f32 %v368, %v347
        %v370 = vmax.f32 %v320, %v324
        %v371 = vmax.f32 %v370, %v328
        %v372 = vmax.f32 %v371, %v332
        %v373 = vmax.f32 %v372, %v336
        %v374 = vmax.f32 %v373, %v340
        %v375 = vmax.f32 %v374, %v344
        %v376 = vmax.f32 %v375, %v348
        %v377 = vld [vmem:[%s2] sm:$0xff]
        %v378 = vld [vmem:[%s2 + $0x8] sm:$0xff]
        %v379 = vld [vmem:[%s3] sm:$0xff]
        %v380 = vld [vmem:[%s3 + $0x8] sm:$0xff]
        %382 = vset.pattern.permute.xlu0 0
        %383 = vperm.xlu0 %382, %v379
        %v384 = vpop.permute.xlu0 %383
        %387 = vset.pattern.permute.xlu0 0
        %388 = vperm.xlu0 %387, %v380
        %v389 = vpop.permute.xlu0 %388
        %vm391 = vcmask 64512
        %v393 = vsel %vm391, %v377, 0
        %v396 = vsel %vm391, %v378, 0
        %398 = vmatprep.subr.mxu0 0.0
        %399 = vmatpush1.msra.mxu0 0.0
        %400 = vmatprep.subr.mxu0 0.0
        %401 = vmatpush1.msra.mxu0 0.0
        %402 = vmatprep.subr.mxu0 0.0
        %403 = vmatpush1.msra.mxu0 0.0
        %404 = vmatprep.subr.mxu0 0.0
        %405 = vmatpush1.msra.mxu0 0.0
        %406 = vmatprep.subr.mxu0 0.0
        %407 = vmatpush1.msra.mxu0 0.0
        %408 = vmatprep.subr.mxu0 0.0
        %409 = vmatpush1.msra.mxu0 0.0
        %410 = vmatprep.subr.mxu0 0.0
        %411 = vmatpush1.msra.mxu0 0.0
        %412 = vmatprep.subr.mxu0 0.0
        %413 = vmatpush1.msra.mxu0 0.0
        %414 = vmatprep.subr.mxu0 0.0
        %415 = vmatpush1.msra.mxu0 0.0
        %416 = vmatprep.subr.mxu0 0.0
        %417 = vmatpush1.msra.mxu0 0.0
        %418 = vmatprep.subr.mxu0 0.0
        %419 = vmatpush1.msra.mxu0 0.0
        %420 = vmatprep.subr.mxu0 0.0
        %421 = vmatpush1.msra.mxu0 0.0
        %422 = vmatprep.subr.mxu0 0.0
        %423 = vmatpush1.msra.mxu0 0.0
        %424 = vmatprep.subr.mxu0 0.0
        %425 = vmatpush1.msra.mxu0 0.0
        %426 = vmatprep.subr.mxu0 0.0
        %427 = vmatpush1.msra.mxu0 0.0
        %428 = vmatprep.subr.mxu0 %v362
        %429 = vmatpush1.msra.mxu0 %v355
        %430 = vmatprep.subr.mxu0 0.0
        %431 = vmatpush2.msra.mxu0 0.0
        %432 = vmatprep.subr.mxu0 0.0
        %433 = vmatpush2.msra.mxu0 0.0
        %434 = vmatprep.subr.mxu0 0.0
        %435 = vmatpush2.msra.mxu0 0.0
        %436 = vmatprep.subr.mxu0 0.0
        %437 = vmatpush2.msra.mxu0 0.0
        %438 = vmatprep.subr.mxu0 0.0
        %439 = vmatpush2.msra.mxu0 0.0
        %440 = vmatprep.subr.mxu0 0.0
        %441 = vmatpush2.msra.mxu0 0.0
        %442 = vmatprep.subr.mxu0 0.0
        %443 = vmatpush2.msra.mxu0 0.0
        %444 = vmatprep.subr.mxu0 0.0
        %445 = vmatpush2.msra.mxu0 0.0
        %446 = vmatprep.subr.mxu0 0.0
        %447 = vmatpush2.msra.mxu0 0.0
        %448 = vmatprep.subr.mxu0 0.0
        %449 = vmatpush2.msra.mxu0 0.0
        %450 = vmatprep.subr.mxu0 0.0
        %451 = vmatpush2.msra.mxu0 0.0
        %452 = vmatprep.subr.mxu0 0.0
        %453 = vmatpush2.msra.mxu0 0.0
        %454 = vmatprep.subr.mxu0 0.0
        %455 = vmatpush2.msra.mxu0 0.0
        %456 = vmatprep.subr.mxu0 0.0
        %457 = vmatpush2.msra.mxu0 0.0
        %458 = vmatprep.subr.mxu0 0.0
        %459 = vmatpush2.msra.mxu0 0.0
        %460 = vmatprep.subr.mxu0 0.0
        %461 = vmatpush2.msra.mxu0 0.0
        %462 = vmatprep.mubr.f32.mxu0 0.0
        %463 = vmatmul.mubr.f32.gmra.mxu0 %v393
        %v464 = vpop.f32.mrf.mxu0
        %v465 = vadd.f32 %v384, %v464
        %v466 = vpop.f32.mrf.mxu0
        %v467 = vadd.f32 %v384, %v466
        %468 = vmatprep.mubr.f32.mxu0 0.0
        %469 = vmatmul.mubr.f32.gmra.mxu0 %v396
        %v470 = vpop.f32.mrf.mxu0
        %v471 = vadd.f32 %v389, %v470
        %v472 = vpop.f32.mrf.mxu0
        %v473 = vadd.f32 %v389, %v472
        %474 = vdwg.mxu0
        %475 = vmatprep.subr.mxu0 0.0
        %476 = vmatpush1.msra.mxu0 0.0
        %477 = vmatprep.subr.mxu0 0.0
        %478 = vmatpush1.msra.mxu0 0.0
        %479 = vmatprep.subr.mxu0 0.0
        %480 = vmatpush1.msra.mxu0 0.0
        %481 = vmatprep.subr.mxu0 0.0
        %482 = vmatpush1.msra.mxu0 0.0
        %483 = vmatprep.subr.mxu0 0.0
        %484 = vmatpush1.msra.mxu0 0.0
        %485 = vmatprep.subr.mxu0 0.0
        %486 = vmatpush1.msra.mxu0 0.0
        %487 = vmatprep.subr.mxu0 0.0
        %488 = vmatpush1.msra.mxu0 0.0
        %489 = vmatprep.subr.mxu0 0.0
        %490 = vmatpush1.msra.mxu0 0.0
        %491 = vmatprep.subr.mxu0 0.0
        %492 = vmatpush1.msra.mxu0 0.0
        %493 = vmatprep.subr.mxu0 0.0
        %494 = vmatpush1.msra.mxu0 0.0
        %495 = vmatprep.subr.mxu0 0.0
        %496 = vmatpush1.msra.mxu0 0.0
        %497 = vmatprep.subr.mxu0 0.0
        %498 = vmatpush1.msra.mxu0 0.0
        %499 = vmatprep.subr.mxu0 0.0
        %500 = vmatpush1.msra.mxu0 0.0
        %501 = vmatprep.subr.mxu0 0.0
        %502 = vmatpush1.msra.mxu0 0.0
        %503 = vmatprep.subr.mxu0 0.0
        %504 = vmatpush1.msra.mxu0 0.0
        %505 = vmatprep.subr.mxu0 %v376
        %506 = vmatpush1.msra.mxu0 %v369
        %507 = vmatprep.subr.mxu0 0.0
        %508 = vmatpush2.msra.mxu0 0.0
        %509 = vmatprep.subr.mxu0 0.0
        %510 = vmatpush2.msra.mxu0 0.0
        %511 = vmatprep.subr.mxu0 0.0
        %512 = vmatpush2.msra.mxu0 0.0
        %513 = vmatprep.subr.mxu0 0.0
        %514 = vmatpush2.msra.mxu0 0.0
        %515 = vmatprep.subr.mxu0 0.0
        %516 = vmatpush2.msra.mxu0 0.0
        %517 = vmatprep.subr.mxu0 0.0
        %518 = vmatpush2.msra.mxu0 0.0
        %519 = vmatprep.subr.mxu0 0.0
        %520 = vmatpush2.msra.mxu0 0.0
        %521 = vmatprep.subr.mxu0 0.0
        %522 = vmatpush2.msra.mxu0 0.0
        %523 = vmatprep.subr.mxu0 0.0
        %524 = vmatpush2.msra.mxu0 0.0
        %525 = vmatprep.subr.mxu0 0.0
        %526 = vmatpush2.msra.mxu0 0.0
        %527 = vmatprep.subr.mxu0 0.0
        %528 = vmatpush2.msra.mxu0 0.0
        %529 = vmatprep.subr.mxu0 0.0
        %530 = vmatpush2.msra.mxu0 0.0
        %531 = vmatprep.subr.mxu0 0.0
        %532 = vmatpush2.msra.mxu0 0.0
        %533 = vmatprep.subr.mxu0 0.0
        %534 = vmatpush2.msra.mxu0 0.0
        %535 = vmatprep.subr.mxu0 0.0
        %536 = vmatpush2.msra.mxu0 0.0
        %537 = vmatprep.subr.mxu0 0.0
        %538 = vmatpush2.msra.mxu0 0.0
        %539 = vmatprep.mubr.f32.mxu0 0.0
        %540 = vmatmul.mubr.f32.gmra.mxu0 %v393
        %v541 = vpop.f32.mrf.mxu0
        %v542 = vadd.f32 %v384, %v541
        %v543 = vpop.f32.mrf.mxu0
        %v544 = vadd.f32 %v384, %v543
        %545 = vmatprep.mubr.f32.mxu0 0.0
        %546 = vmatmul.mubr.f32.gmra.mxu0 %v396
        %v547 = vpop.f32.mrf.mxu0
        %v548 = vadd.f32 %v389, %v547
        %v549 = vpop.f32.mrf.mxu0
        %v550 = vadd.f32 %v389, %v549
        %551 = vdwg.mxu0
        %v552 = vld [vmem:[%s314] sm:$0xff]
        %v553 = vld [vmem:[%s314 + $0x8] sm:$0xff]
        %v554 = vld [vmem:[%s314 + $0x10] sm:$0xff]
        %v555 = vld [vmem:[%s314 + $0x18] sm:$0xff]
        %v556 = vld [vmem:[%s4] sm:$0xff]
        %v557 = vld [vmem:[%s4 + $0x8] sm:$0xff]
        %v558 = vld [vmem:[%s5] sm:$0xff]
        %v559 = vld [vmem:[%s5 + $0x8] sm:$0xff]
        %561 = vset.pattern.permute.xlu0 0
        %562 = vperm.xlu0 %561, %v558
        %v563 = vpop.permute.xlu0 %562
        %566 = vset.pattern.permute.xlu0 0
        %567 = vperm.xlu0 %566, %v559
        %v568 = vpop.permute.xlu0 %567
        %v571 = vsel %vm391, %v556, 0
        %v574 = vsel %vm391, %v557, 0
        %576 = vmatprep.subr.mxu0 0.0
        %577 = vmatpush1.msra.mxu0 0.0
        %578 = vmatprep.subr.mxu0 0.0
        %579 = vmatpush1.msra.mxu0 0.0
        %580 = vmatprep.subr.mxu0 0.0
        %581 = vmatpush1.msra.mxu0 0.0
        %582 = vmatprep.subr.mxu0 0.0
        %583 = vmatpush1.msra.mxu0 0.0
        %584 = vmatprep.subr.mxu0 0.0
        %585 = vmatpush1.msra.mxu0 0.0
        %586 = vmatprep.subr.mxu0 0.0
        %587 = vmatpush1.msra.mxu0 0.0
        %588 = vmatprep.subr.mxu0 0.0
        %589 = vmatpush1.msra.mxu0 0.0
        %590 = vmatprep.subr.mxu0 0.0
        %591 = vmatpush1.msra.mxu0 0.0
        %592 = vmatprep.subr.mxu0 0.0
        %593 = vmatpush1.msra.mxu0 0.0
        %594 = vmatprep.subr.mxu0 0.0
        %595 = vmatpush1.msra.mxu0 0.0
        %596 = vmatprep.subr.mxu0 0.0
        %597 = vmatpush1.msra.mxu0 0.0
        %598 = vmatprep.subr.mxu0 0.0
        %599 = vmatpush1.msra.mxu0 0.0
        %600 = vmatprep.subr.mxu0 0.0
        %601 = vmatpush1.msra.mxu0 0.0
        %602 = vmatprep.subr.mxu0 0.0
        %603 = vmatpush1.msra.mxu0 0.0
        %604 = vmatprep.subr.mxu0 0.0
        %605 = vmatpush1.msra.mxu0 0.0
        %606 = vmatprep.subr.mxu0 %v553
        %607 = vmatpush1.msra.mxu0 %v552
        %608 = vmatprep.subr.mxu0 0.0
        %609 = vmatpush2.msra.mxu0 0.0
        %610 = vmatprep.subr.mxu0 0.0
        %611 = vmatpush2.msra.mxu0 0.0
        %612 = vmatprep.subr.mxu0 0.0
        %613 = vmatpush2.msra.mxu0 0.0
        %614 = vmatprep.subr.mxu0 0.0
        %615 = vmatpush2.msra.mxu0 0.0
        %616 = vmatprep.subr.mxu0 0.0
        %617 = vmatpush2.msra.mxu0 0.0
        %618 = vmatprep.subr.mxu0 0.0
        %619 = vmatpush2.msra.mxu0 0.0
        %620 = vmatprep.subr.mxu0 0.0
        %621 = vmatpush2.msra.mxu0 0.0
        %622 = vmatprep.subr.mxu0 0.0
        %623 = vmatpush2.msra.mxu0 0.0
        %624 = vmatprep.subr.mxu0 0.0
        %625 = vmatpush2.msra.mxu0 0.0
        %626 = vmatprep.subr.mxu0 0.0
        %627 = vmatpush2.msra.mxu0 0.0
        %628 = vmatprep.subr.mxu0 0.0
        %629 = vmatpush2.msra.mxu0 0.0
        %630 = vmatprep.subr.mxu0 0.0
        %631 = vmatpush2.msra.mxu0 0.0
        %632 = vmatprep.subr.mxu0 0.0
        %633 = vmatpush2.msra.mxu0 0.0
        %634 = vmatprep.subr.mxu0 0.0
        %635 = vmatpush2.msra.mxu0 0.0
        %636 = vmatprep.subr.mxu0 0.0
        %637 = vmatpush2.msra.mxu0 0.0
        %638 = vmatprep.subr.mxu0 0.0
        %639 = vmatpush2.msra.mxu0 0.0
        %640 = vmatprep.mubr.f32.mxu0 0.0
        %641 = vmatmul.mubr.f32.gmra.mxu0 %v571
        %v642 = vpop.f32.mrf.mxu0
        %v643 = vadd.f32 %v563, %v642
        %v644 = vpop.f32.mrf.mxu0
        %v645 = vadd.f32 %v563, %v644
        %646 = vmatprep.mubr.f32.mxu0 0.0
        %647 = vmatmul.mubr.f32.gmra.mxu0 %v574
        %v648 = vpop.f32.mrf.mxu0
        %v649 = vadd.f32 %v568, %v648
        %v650 = vpop.f32.mrf.mxu0
        %v651 = vadd.f32 %v568, %v650
        %652 = vdwg.mxu0
        %653 = vmatprep.subr.mxu0 0.0
        %654 = vmatpush1.msra.mxu0 0.0
        %655 = vmatprep.subr.mxu0 0.0
        %656 = vmatpush1.msra.mxu0 0.0
        %657 = vmatprep.subr.mxu0 0.0
        %658 = vmatpush1.msra.mxu0 0.0
        %659 = vmatprep.subr.mxu0 0.0
        %660 = vmatpush1.msra.mxu0 0.0
        %661 = vmatprep.subr.mxu0 0.0
        %662 = vmatpush1.msra.mxu0 0.0
        %663 = vmatprep.subr.mxu0 0.0
        %664 = vmatpush1.msra.mxu0 0.0
        %665 = vmatprep.subr.mxu0 0.0
        %666 = vmatpush1.msra.mxu0 0.0
        %667 = vmatprep.subr.mxu0 0.0
        %668 = vmatpush1.msra.mxu0 0.0
        %669 = vmatprep.subr.mxu0 0.0
        %670 = vmatpush1.msra.mxu0 0.0
        %671 = vmatprep.subr.mxu0 0.0
        %672 = vmatpush1.msra.mxu0 0.0
        %673 = vmatprep.subr.mxu0 0.0
        %674 = vmatpush1.msra.mxu0 0.0
        %675 = vmatprep.subr.mxu0 0.0
        %676 = vmatpush1.msra.mxu0 0.0
        %677 = vmatprep.subr.mxu0 0.0
        %678 = vmatpush1.msra.mxu0 0.0
        %679 = vmatprep.subr.mxu0 0.0
        %680 = vmatpush1.msra.mxu0 0.0
        %681 = vmatprep.subr.mxu0 0.0
        %682 = vmatpush1.msra.mxu0 0.0
        %683 = vmatprep.subr.mxu0 %v555
        %684 = vmatpush1.msra.mxu0 %v554
        %685 = vmatprep.subr.mxu0 0.0
        %686 = vmatpush2.msra.mxu0 0.0
        %687 = vmatprep.subr.mxu0 0.0
        %688 = vmatpush2.msra.mxu0 0.0
        %689 = vmatprep.subr.mxu0 0.0
        %690 = vmatpush2.msra.mxu0 0.0
        %691 = vmatprep.subr.mxu0 0.0
        %692 = vmatpush2.msra.mxu0 0.0
        %693 = vmatprep.subr.mxu0 0.0
        %694 = vmatpush2.msra.mxu0 0.0
        %695 = vmatprep.subr.mxu0 0.0
        %696 = vmatpush2.msra.mxu0 0.0
        %697 = vmatprep.subr.mxu0 0.0
        %698 = vmatpush2.msra.mxu0 0.0
        %699 = vmatprep.subr.mxu0 0.0
        %700 = vmatpush2.msra.mxu0 0.0
        %701 = vmatprep.subr.mxu0 0.0
        %702 = vmatpush2.msra.mxu0 0.0
        %703 = vmatprep.subr.mxu0 0.0
        %704 = vmatpush2.msra.mxu0 0.0
        %705 = vmatprep.subr.mxu0 0.0
        %706 = vmatpush2.msra.mxu0 0.0
        %707 = vmatprep.subr.mxu0 0.0
        %708 = vmatpush2.msra.mxu0 0.0
        %709 = vmatprep.subr.mxu0 0.0
        %710 = vmatpush2.msra.mxu0 0.0
        %711 = vmatprep.subr.mxu0 0.0
        %712 = vmatpush2.msra.mxu0 0.0
        %713 = vmatprep.subr.mxu0 0.0
        %714 = vmatpush2.msra.mxu0 0.0
        %715 = vmatprep.subr.mxu0 0.0
        %716 = vmatpush2.msra.mxu0 0.0
        %717 = vmatprep.mubr.f32.mxu0 0.0
        %718 = vmatmul.mubr.f32.gmra.mxu0 %v571
        %v719 = vpop.f32.mrf.mxu0
        %v720 = vadd.f32 %v563, %v719
        %v721 = vpop.f32.mrf.mxu0
        %v722 = vadd.f32 %v563, %v721
        %723 = vmatprep.mubr.f32.mxu0 0.0
        %724 = vmatmul.mubr.f32.gmra.mxu0 %v574
        %v725 = vpop.f32.mrf.mxu0
        %v726 = vadd.f32 %v568, %v725
        %v727 = vpop.f32.mrf.mxu0
        %v728 = vadd.f32 %v568, %v727
        %729 = vdwg.mxu0
        %v730 = vadd.f32 %v465, %v643
        %v731 = vadd.f32 %v467, %v645
        %v732 = vadd.f32 %v542, %v720
        %v733 = vadd.f32 %v544, %v722
        %v734 = vadd.f32 %v471, %v649
        %v735 = vadd.f32 %v473, %v651
        %v736 = vadd.f32 %v548, %v726
        %v737 = vadd.f32 %v550, %v728
        %v738 = vmax.f32 %v730, 0.0
        %v739 = vmax.f32 %v731, 0.0
        %v740 = vmax.f32 %v732, 0.0
        %v741 = vmax.f32 %v733, 0.0
        %v742 = vmax.f32 %v734, 0.0
        %v743 = vmax.f32 %v735, 0.0
        %v744 = vmax.f32 %v736, 0.0
        %v745 = vmax.f32 %v737, 0.0
        %746 = vst [vmem:[%s295] sm:$0xff] %v738
        %747 = vst [vmem:[%s295 + $0x8] sm:$0xff] %v739
        %748 = vst [vmem:[%s295 + $0x10] sm:$0xff] %v740
        %749 = vst [vmem:[%s295 + $0x18] sm:$0xff] %v741
        %750 = vst [vmem:[%s295 + $0x20] sm:$0xff] %v742
        %751 = vst [vmem:[%s295 + $0x28] sm:$0xff] %v743
        %752 = vst [vmem:[%s295 + $0x30] sm:$0xff] %v744
        %753 = vst [vmem:[%s295 + $0x38] sm:$0xff] %v745
        %s754 = sand.u32 %s182, 1
        %s755 = scalar_lea.sflag [#allocation3], %s754
        %s756 = sand.u32 %s182, 1
        %s757 = smul.addr %s756, 64
        %s758 = scalar_lea.vmem [#allocation2], %s757
        // Predicated region
        $region45: #{bottleneck_forward.3} parent=43 // pred_check
          %p759 = pneg %p192
        $region46: #{bottleneck_forward.3} parent=43 // pred_check_branch
          %761 = sbr.rel (%p759) target = $region48
        $region47: #{bottleneck_forward.3} parent=43 // pred_region
          %s762 = smul.u32 4, %s25
          %s764 = ssub.s32 1024, 1024
          %765 = vsyncadd %s755, %s764
          %s766 = smul.addr %s24, 8
          %s767 = sadd.s32 %s762, %s766
          %s768 = smul.addr %s767, 128
          %s769 = scalar_lea.hbm %s6, %s768
          %s770 = sshll.u32 %s758, 4
          %s771 = int_to_ptr.vmem [resolvable:$true] %s770
          %776 = dma.vmem_to_hbm [thread:$0]  %s771, 1024, %s769, %s755, 512, 512, 32
        $region48: #{bottleneck_forward.3} parent=43 // pred_fallthru
          _
      $region44: #{bottleneck_forward.3} parent=5 // pred_fallthru
        _
      %p777 = scmp.le.s32.totalorder 2, %s15
      // Predicated region
      $region49: #{bottleneck_forward.3} parent=5 // pred_check
        %p778 = pneg %p777
      $region50: #{bottleneck_forward.3} parent=5 // pred_check_branch
        %780 = sbr.rel (%p778) target = $region52
      $region51: #{bottleneck_forward.3} parent=5 // pred_region
        %s781 = ssub.s32 %s15, 2
        // Predicated region
        $region53: #{bottleneck_forward.3} parent=51 // pred_check
          %p782 = pneg %p198
        $region54: #{bottleneck_forward.3} parent=51 // pred_check_branch
          %784 = sbr.rel (%p782) target = $region56
        $region55: #{bottleneck_forward.3} parent=51 // pred_region
          %s785 = sand.u32 %s183, 1
          %s786 = scalar_lea.sflag [#allocation3], %s785
          %s787 = sand.u32 %s183, 1
          %s788 = smul.addr %s787, 64
          %s789 = scalar_lea.vmem [#allocation2], %s788
          %790 = dma.done %s786, 1024
        $region56: #{bottleneck_forward.3} parent=51 // pred_fallthru
          _
      $region52: #{bottleneck_forward.3} parent=5 // pred_fallthru
        _
    $region6: #{bottleneck_forward.3} parent=1 // loop_footer
      %s19 = sadd.s32 1, %s15
    $region7: #{bottleneck_forward.3} parent=1 // loop_footer_branch
      %14 = sbr.rel target = $region3
    $region8: #{bottleneck_forward.3} parent=1 // loop_exit
      _
    %791 = vsyncpa [#allocation3], 1
    %s792 = scalar_lea.sflag [#allocation3], 1
    %793 = vsyncpa %s792, 1

</llo_original>
